<compile_context>
chip_gen: v7x
topology: tpu7x:2x2x1
jax: 0.10.0
libtpu: 0.0.40
codegen_flags: <defaults>
</compile_context>

<pallas_src>
import functools

import numpy as np
import jax
import jax.numpy as jnp
from jax.experimental import pallas as pl
from jax.experimental.pallas import tpu as pltpu

LN_EPS = 1e-5  # nn.LayerNorm default


# ------------------------------- Pallas kernel -------------------------------


def patch_embed_kernel(p_ref, w_ref, b_ref, g_ref, beta_ref, o_ref, *, use_norm):
    # p_ref: (TM, K) bf16 patch tile; w_ref: (K, E) bf16; b/g/beta: (1, E) f32
    y = jnp.dot(p_ref[...], w_ref[...], preferred_element_type=jnp.float32)
    y = y + b_ref[...]
    if use_norm:  # fused LayerNorm (f32 math), skipped entirely when Identity
        m = jnp.mean(y, axis=-1, keepdims=True)
        v = jnp.mean((y - m) ** 2, axis=-1, keepdims=True)
        y = (y - m) * jax.lax.rsqrt(v + LN_EPS) * g_ref[...] + beta_ref[...]
    o_ref[...] = y.astype(o_ref.dtype)


# ------------------------------ wrapper / glue -------------------------------


def _round_up(x, m):
    return ((x + m - 1) // m) * m


def _choose_tm(M):
    # Largest sublane-aligned tile <= 512 that still yields >= 2 grid steps
    # when possible (so the "parallel" axis can shard across v7x's 2 TCs).
    return max(8, min(512, _round_up(max(M // 2, 8), 8)))


def patch_embed(x, w_t, b, gamma, beta, patch_size, use_norm,
                compute_dtype=jnp.bfloat16):
    """PatchEmbed.forward.  x: (B, C, H, W) f32.  Returns (tokens, Hp, Wp)."""
    B, C, H, W = x.shape
    p = patch_size
    K = C * p * p
    E = w_t.shape[1]

    # pad right/bottom so H, W are multiples of the patch size (as F.pad does)
    pad_h = (p - H % p) % p
    pad_w = (p - W % p) % p
    if pad_h or pad_w:
        x = jnp.pad(x, ((0, 0), (0, 0), (0, pad_h), (0, pad_w)))
    Hp, Wp = (H + pad_h) // p, (W + pad_w) // p

    # im2col: (B, C, Hp, p, Wp, p) -> (B, Hp, Wp, C, p, p) -> (M, K)
    # (c, i, j) flattening matches Conv2d's OIHW weight layout.
    patches = (x.reshape(B, C, Hp, p, Wp, p)
                .transpose(0, 2, 4, 1, 3, 5)
                .reshape(B * Hp * Wp, K))

    M = B * Hp * Wp
    TM = _choose_tm(M)
    M_pad = _round_up(M, TM)
    if M_pad != M:
        patches = jnp.pad(patches, ((0, M_pad - M), (0, 0)))

    # bf16 operands for the MXU; accumulation stays f32 inside the kernel.
    patches = patches.astype(compute_dtype)
    w_c = w_t.astype(compute_dtype)

    kernel = functools.partial(patch_embed_kernel, use_norm=use_norm)
    out = pl.pallas_call(
        kernel,
        out_shape=jax.ShapeDtypeStruct((M_pad, E), jnp.float32),
        grid=(M_pad // TM,),
        in_specs=[
            pl.BlockSpec((TM, K), lambda i: (i, 0)),   # patch tile (streamed)
            pl.BlockSpec((K, E), lambda i: (0, 0)),    # weight (VMEM-resident)
            pl.BlockSpec((1, E), lambda i: (0, 0)),    # bias
            pl.BlockSpec((1, E), lambda i: (0, 0)),    # LN gamma
            pl.BlockSpec((1, E), lambda i: (0, 0)),    # LN beta
        ],
        out_specs=pl.BlockSpec((TM, E), lambda i: (i, 0)),
        compiler_params=pltpu.CompilerParams(dimension_semantics=("parallel",)),
    )(patches, w_c, b, gamma, beta)

    return out[:M].reshape(B, Hp * Wp, E), Hp, Wp


# --------------------------- pure-JAX f32 reference ---------------------------


def reference_forward(x, w_t, b, gamma, beta, patch_size, use_norm):
    B, C, H, W = x.shape
    p = patch_size
    E = w_t.shape[1]
    pad_h = (p - H % p) % p
    pad_w = (p - W % p) % p
    x = jnp.pad(x, ((0, 0), (0, 0), (0, pad_h), (0, pad_w)))
    w_oihw = w_t.T.reshape(E, C, p, p)
    y = jax.lax.conv_general_dilated(
        x, w_oihw, window_strides=(p, p), padding="VALID",
        dimension_numbers=("NCHW", "OIHW", "NCHW"),
        precision=jax.lax.Precision.HIGHEST)
    y = y + b.reshape(1, E, 1, 1)
    Hp, Wp = y.shape[2], y.shape[3]
    y = y.reshape(B, E, Hp * Wp).transpose(0, 2, 1)          # flatten(2).T(1,2)
    if use_norm:
        m = jnp.mean(y, axis=-1, keepdims=True)
        v = jnp.mean((y - m) ** 2, axis=-1, keepdims=True)
        y = (y - m) * jax.lax.rsqrt(v + LN_EPS) * gamma + beta
    return y, Hp, Wp


# ----------------------------------- main -------------------------------------


if __name__ == "__main__":
    # Small shapes; H=W=17 exercises the pad-to-multiple-of-patch path.
    B, in_c, H, W = 2, 3, 17, 17
    patch_size, embed_dim = 4, 128   # embed_dim=128 -> lane-dense output stores

    key = jax.random.PRNGKey(0)
    kx, kw, kb, kg = jax.random.split(key, 4)
    K = in_c * patch_size * patch_size
    x = jax.random.normal(kx, (B, in_c, H, W), jnp.float32)
    w_t = 0.05 * jax.random.normal(kw, (K, embed_dim), jnp.float32)   # (K, E)
    b = 0.05 * jax.random.normal(kb, (1, embed_dim), jnp.float32)
    gamma = 1.0 + 0.1 * jax.random.normal(kg, (1, embed_dim), jnp.float32)
    beta = jnp.zeros((1, embed_dim), jnp.float32)

    for use_norm in (False, True):   # norm_layer=None (Identity) and LayerNorm
        out, Hp, Wp = patch_embed(x, w_t, b, gamma, beta, patch_size, use_norm)
        out = jax.block_until_ready(out)
        ref, Hr, Wr = reference_forward(x, w_t, b, gamma, beta, patch_size, use_norm)
        assert (Hp, Wp) == (Hr, Wr) == (5, 5)
        # bf16 MXU operands vs f32 reference -> relaxed tolerance
        np.testing.assert_allclose(np.asarray(out), np.asarray(ref),
                                   rtol=2e-2, atol=2e-2)

    print("KERNEL_OK")
</pallas_src>

<mosaic_0001>
module attributes {stable_mosaic.version = 11 : i64} {
  func.func @patch_embed_kernel(%arg0: i32, %arg1: memref<32x48xbf16, #tpu.memory_space<vmem>>, %arg2: memref<48x128xbf16, #tpu.memory_space<vmem>>, %arg3: memref<1x128xf32, #tpu.memory_space<vmem>>, %arg4: memref<1x128xf32, #tpu.memory_space<vmem>>, %arg5: memref<1x128xf32, #tpu.memory_space<vmem>>, %arg6: memref<32x128xf32, #tpu.memory_space<vmem>>) attributes {dimension_semantics = [#tpu.dimension_semantics<parallel>], iteration_bounds = array<i64: 2>, scalar_prefetch = 0 : i64, scratch_operands = 0 : i64, tpu.core_type = #tpu.core_type<tc>, window_params = [{transform_indices = @transform_0, window_bounds = array<i64: 32, 48>}, {pipeline_mode = #tpu.pipeline_mode<synchronous>, transform_indices = @transform_1, window_bounds = array<i64: 48, 128>}, {pipeline_mode = #tpu.pipeline_mode<synchronous>, transform_indices = @transform_2, window_bounds = array<i64: 1, 128>}, {pipeline_mode = #tpu.pipeline_mode<synchronous>, transform_indices = @transform_3, window_bounds = array<i64: 1, 128>}, {pipeline_mode = #tpu.pipeline_mode<synchronous>, transform_indices = @transform_4, window_bounds = array<i64: 1, 128>}, {transform_indices = @transform_5, window_bounds = array<i64: 32, 128>}]} {
    %c0 = arith.constant 0 : index
    %c0_0 = arith.constant 0 : index
    %0 = vector.load %arg1[%c0, %c0_0] : memref<32x48xbf16, #tpu.memory_space<vmem>>, vector<32x48xbf16>
    %c0_1 = arith.constant 0 : index
    %c0_2 = arith.constant 0 : index
    %1 = vector.load %arg2[%c0_1, %c0_2] : memref<48x128xbf16, #tpu.memory_space<vmem>>, vector<48x128xbf16>
    %cst = arith.constant dense<0.000000e+00> : vector<32x128xf32>
    %2 = tpu.matmul %0, %1, %cst {dimension_numbers = #tpu.dot_dimension_numbers<[1], [0], [0], [1], [0, 0, 1, 1], [], []>} : vector<32x48xbf16>, vector<48x128xbf16>, vector<32x128xf32> -> vector<32x128xf32>
    %c0_3 = arith.constant 0 : index
    %c0_4 = arith.constant 0 : index
    %3 = vector.load %arg3[%c0_3, %c0_4] : memref<1x128xf32, #tpu.memory_space<vmem>>, vector<1x128xf32>
    %4 = vector.broadcast %3 : vector<1x128xf32> to vector<32x128xf32>
    %5 = arith.addf %2, %4 : vector<32x128xf32>
    %c0_5 = arith.constant 0 : index
    %c0_6 = arith.constant 0 : index
    %6 = vector.load %arg6[%c0_5, %c0_6] : memref<32x128xf32, #tpu.memory_space<vmem>>, vector<32x128xf32>
    tpu.vector_store %arg6[%c0_5, %c0_6], %5 {strides = array<i32>} : memref<32x128xf32, #tpu.memory_space<vmem>>, vector<32x128xf32>,
    return
  }
  func.func @transform_0(%arg0: i32) -> (i32, i32) {
    %c0_i32 = arith.constant 0 : i32
    %c0_i32_0 = arith.constant 0 : i32
    return %arg0, %c0_i32 : i32, i32
  }
  func.func @transform_1(%arg0: i32) -> (i32, i32) {
    %c0_i32 = arith.constant 0 : i32
    %c0_i32_0 = arith.constant 0 : i32
    %c0_i32_1 = arith.constant 0 : i32
    return %c0_i32, %c0_i32_0 : i32, i32
  }
  func.func @transform_2(%arg0: i32) -> (i32, i32) {
    %c0_i32 = arith.constant 0 : i32
    %c0_i32_0 = arith.constant 0 : i32
    %c0_i32_1 = arith.constant 0 : i32
    return %c0_i32, %c0_i32_0 : i32, i32
  }
  func.func @transform_3(%arg0: i32) -> (i32, i32) {
    %c0_i32 = arith.constant 0 : i32
    %c0_i32_0 = arith.constant 0 : i32
    %c0_i32_1 = arith.constant 0 : i32
    return %c0_i32, %c0_i32_0 : i32, i32
  }
  func.func @transform_4(%arg0: i32) -> (i32, i32) {
    %c0_i32 = arith.constant 0 : i32
    %c0_i32_0 = arith.constant 0 : i32
    %c0_i32_1 = arith.constant 0 : i32
    return %c0_i32, %c0_i32_0 : i32, i32
  }
  func.func @transform_5(%arg0: i32) -> (i32, i32) {
    %c0_i32 = arith.constant 0 : i32
    %c0_i32_0 = arith.constant 0 : i32
    return %arg0, %c0_i32 : i32, i32
  }
}

</mosaic_0001>

<llo_original>
// kernel: tpu_custom_call.1
$region0: #{tpu_custom_call.1}
  #allocation0 [shape = 'u32[]', space=smem, size = 0x4, offset = 0x4, fixed_abs, tag = 'smem constant byte address 0x4 - core index']
  #allocation1 [shape = 'u32[144,128]{1,0:T(1,128)}', space=vmem, size = 0x12000, scoped, tag = 'internal scratch']
  %s0 = inlined_call_operand.vmem [shape: bf16[64,48], index: 0, kind: input, shape index: {}]
  %s1 = inlined_call_operand.vmem [shape: bf16[48,128], index: 1, kind: input, shape index: {}]
  %s2 = inlined_call_operand.vmem [shape: f32[1,128], index: 2, kind: input, shape index: {}]
  %s3 = inlined_call_operand.vmem [shape: f32[1,128], index: 3, kind: input, shape index: {}]
  %s4 = inlined_call_operand.vmem [shape: f32[1,128], index: 4, kind: input, shape index: {}]
  %s5 = inlined_call_operand.hbm [shape: f32[64,128], index: 5, kind: output, shape index: {}]
  %s6 = sld [smem:[#allocation0]]
  $region53: #{tpu_custom_call.1} parent=0
    _
  %s8 = ssub.s32 1, %s6
  %s9 = scalar_select 0, %s8, %s6
  $region1: #{tpu_custom_call.1} parent=0
    #allocation2 [shape = 'u8[32768]{0}', space=vmem, size = 0x8000, scoped, tag = 'output window, operand 0']
    #allocation3 [shape = 's32[2]{0}', space=sflag, size = 0x8, scoped, tag = 'scoped memory for tpu_custom_call.1']
    %10 = vsyncpa [#allocation3], 0
    %s11 = scalar_lea.sflag [#allocation3], 1
    %12 = vsyncpa %s11, 0
    loop: start=0, step=1, limit=4
    $region2: #{tpu_custom_call.1} parent=1 // loop_pre_header
      _
    $region3: #{tpu_custom_call.1} parent=1 // loop_header
      %s14 = sphi 0, %s18
      %p15 = scmp.ge.s32.totalorder %s14, 4
      %s24 = sphi 0, %s26
      %s27 = sphi 0, %s24
      %s28 = sphi 0, %s27
      %s44 = sphi 0, %s28
      %s48 = sphi 0, %s48
      %s50 = sphi 0, %s48
      %s51 = sphi 0, %s50
      %s65 = sphi 0, %s51
      %s69 = sphi 0, %s69
      %s71 = sphi 0, %s69
      %s72 = sphi 0, %s71
      %s86 = sphi 0, %s72
      %s90 = sphi 0, %s90
      %s92 = sphi 0, %s90
      %s93 = sphi 0, %s92
      %s107 = sphi 0, %s93
      %s111 = sphi 0, %s111
      %s113 = sphi 0, %s111
      %s114 = sphi 0, %s113
      %s128 = sphi 0, %s114
      %s134 = sphi 0, %s136
      %s137 = sphi 0, %s134
      %s138 = sphi 0, %s137
      %s154 = sphi 0, %s138
    $region4: #{tpu_custom_call.1} parent=1 // loop_header_branch
      %17 = sbr.rel (%p15) target = $region8
    $region5: #{tpu_custom_call.1} parent=1 // loop_body
      %s19 = ssub.s32 %s14, 1
      %s20 = ssub.s32 %s14, 2
      %s21 = sadd.s32 %s14, 1
      %s22 = ssub.s32 %s14, %s21
      %p23 = scmp.eq.s32.totalorder %s22, 0
      %s25 = sadd.s32 %s24, 1
      %s26 = scalar_select %p23, %s24, %s25
      %p29 = pneg %p23
      %p30 = scmp.eq.s32.totalorder %s14, 1
      %p31 = por %p29, %p30
      %p32 = scmp.ne.s32.totalorder %s24, %s27
      %p33 = scmp.eq.s32.totalorder %s14, 0
      %p34 = por %p32, %p33
      %p35 = scmp.ne.s32.totalorder %s24, %s27
      %p36 = scmp.eq.s32.totalorder %s19, 1
      %p37 = por %p35, %p36
      %p38 = scmp.ne.s32.totalorder %s27, %s28
      %p39 = scmp.eq.s32.totalorder %s19, 0
      %p40 = por %p38, %p39
      %p41 = scmp.ne.s32.totalorder %s27, %s28
      %p42 = scmp.eq.s32.totalorder %s20, 1
      %p43 = por %p41, %p42
      %p45 = scmp.ne.s32.totalorder %s28, %s44
      %p46 = scmp.eq.s32.totalorder %s20, 0
      %p47 = por %p45, %p46
      %s49 = sadd.s32 %s48, 1
      %p52 = scmp.eq.s32.totalorder %s14, 1
      %p53 = scmp.ne.s32.totalorder %s48, %s50
      %p54 = scmp.eq.s32.totalorder %s14, 0
      %p55 = por %p53, %p54
      %p56 = scmp.ne.s32.totalorder %s48, %s50
      %p57 = scmp.eq.s32.totalorder %s19, 1
      %p58 = por %p56, %p57
      %p59 = scmp.ne.s32.totalorder %s50, %s51
      %p60 = scmp.eq.s32.totalorder %s19, 0
      %p61 = por %p59, %p60
      %p62 = scmp.ne.s32.totalorder %s50, %s51
      %p63 = scmp.eq.s32.totalorder %s20, 1
      %p64 = por %p62, %p63
      %p66 = scmp.ne.s32.totalorder %s51, %s65
      %p67 = scmp.eq.s32.totalorder %s20, 0
      %p68 = por %p66, %p67
      %s70 = sadd.s32 %s69, 1
      %p73 = scmp.eq.s32.totalorder %s14, 1
      %p74 = scmp.ne.s32.totalorder %s69, %s71
      %p75 = scmp.eq.s32.totalorder %s14, 0
      %p76 = por %p74, %p75
      %p77 = scmp.ne.s32.totalorder %s69, %s71
      %p78 = scmp.eq.s32.totalorder %s19, 1
      %p79 = por %p77, %p78
      %p80 = scmp.ne.s32.totalorder %s71, %s72
      %p81 = scmp.eq.s32.totalorder %s19, 0
      %p82 = por %p80, %p81
      %p83 = scmp.ne.s32.totalorder %s71, %s72
      %p84 = scmp.eq.s32.totalorder %s20, 1
      %p85 = por %p83, %p84
      %p87 = scmp.ne.s32.totalorder %s72, %s86
      %p88 = scmp.eq.s32.totalorder %s20, 0
      %p89 = por %p87, %p88
      %s91 = sadd.s32 %s90, 1
      %p94 = scmp.eq.s32.totalorder %s14, 1
      %p95 = scmp.ne.s32.totalorder %s90, %s92
      %p96 = scmp.eq.s32.totalorder %s14, 0
      %p97 = por %p95, %p96
      %p98 = scmp.ne.s32.totalorder %s90, %s92
      %p99 = scmp.eq.s32.totalorder %s19, 1
      %p100 = por %p98, %p99
      %p101 = scmp.ne.s32.totalorder %s92, %s93
      %p102 = scmp.eq.s32.totalorder %s19, 0
      %p103 = por %p101, %p102
      %p104 = scmp.ne.s32.totalorder %s92, %s93
      %p105 = scmp.eq.s32.totalorder %s20, 1
      %p106 = por %p104, %p105
      %p108 = scmp.ne.s32.totalorder %s93, %s107
      %p109 = scmp.eq.s32.totalorder %s20, 0
      %p110 = por %p108, %p109
      %s112 = sadd.s32 %s111, 1
      %p115 = scmp.eq.s32.totalorder %s14, 1
      %p116 = scmp.ne.s32.totalorder %s111, %s113
      %p117 = scmp.eq.s32.totalorder %s14, 0
      %p118 = por %p116, %p117
      %p119 = scmp.ne.s32.totalorder %s111, %s113
      %p120 = scmp.eq.s32.totalorder %s19, 1
      %p121 = por %p119, %p120
      %p122 = scmp.ne.s32.totalorder %s113, %s114
      %p123 = scmp.eq.s32.totalorder %s19, 0
      %p124 = por %p122, %p123
      %p125 = scmp.ne.s32.totalorder %s113, %s114
      %p126 = scmp.eq.s32.totalorder %s20, 1
      %p127 = por %p125, %p126
      %p129 = scmp.ne.s32.totalorder %s114, %s128
      %p130 = scmp.eq.s32.totalorder %s20, 0
      %p131 = por %p129, %p130
      %s132 = ssub.s32 %s14, %s21
      %p133 = scmp.eq.s32.totalorder %s132, 0
      %s135 = sadd.s32 %s134, 1
      %s136 = scalar_select %p133, %s134, %s135
      %p139 = pneg %p133
      %p140 = scmp.eq.s32.totalorder %s14, 1
      %p141 = por %p139, %p140
      %p142 = scmp.ne.s32.totalorder %s134, %s137
      %p143 = scmp.eq.s32.totalorder %s14, 0
      %p144 = por %p142, %p143
      %p145 = scmp.ne.s32.totalorder %s134, %s137
      %p146 = scmp.eq.s32.totalorder %s19, 1
      %p147 = por %p145, %p146
      %p148 = scmp.ne.s32.totalorder %s137, %s138
      %p149 = scmp.eq.s32.totalorder %s19, 0
      %p150 = por %p148, %p149
      %p151 = scmp.ne.s32.totalorder %s137, %s138
      %p152 = scmp.eq.s32.totalorder %s20, 1
      %p153 = por %p151, %p152
      %p155 = scmp.ne.s32.totalorder %s138, %s154
      %p156 = scmp.eq.s32.totalorder %s20, 0
      %p157 = por %p155, %p156
      %p158 = scmp.le.s32.totalorder 1, %s14
      %p159 = scmp.lt.s32.totalorder %s14, 3
      %p160 = pnand %p158, %p159
      %p161 = pneg %p160
      // Predicated region
      $region9: #{tpu_custom_call.1} parent=5 // pred_check
        _
      $region10: #{tpu_custom_call.1} parent=5 // pred_check_branch
        %163 = sbr.rel (%p160) target = $region12
      $region11: #{tpu_custom_call.1} parent=5 // pred_region
        %s164 = ssub.s32 %s14, 1
        // Predicated region
        $region13: #{tpu_custom_call.1} parent=11 // pred_check
          %p165 = pneg %p61
        $region14: #{tpu_custom_call.1} parent=11 // pred_check_branch
          %167 = sbr.rel (%p165) target = $region16
        $region15: #{tpu_custom_call.1} parent=11 // pred_region
          _
        $region16: #{tpu_custom_call.1} parent=11 // pred_fallthru
          _
        // Predicated region
        $region17: #{tpu_custom_call.1} parent=11 // pred_check
          %p168 = pneg %p82
        $region18: #{tpu_custom_call.1} parent=11 // pred_check_branch
          %170 = sbr.rel (%p168) target = $region20
        $region19: #{tpu_custom_call.1} parent=11 // pred_region
          _
        $region20: #{tpu_custom_call.1} parent=11 // pred_fallthru
          _
        // Predicated region
        $region21: #{tpu_custom_call.1} parent=11 // pred_check
          %p171 = pneg %p103
        $region22: #{tpu_custom_call.1} parent=11 // pred_check_branch
          %173 = sbr.rel (%p171) target = $region24
        $region23: #{tpu_custom_call.1} parent=11 // pred_region
          _
        $region24: #{tpu_custom_call.1} parent=11 // pred_fallthru
          _
        // Predicated region
        $region25: #{tpu_custom_call.1} parent=11 // pred_check
          %p174 = pneg %p124
        $region26: #{tpu_custom_call.1} parent=11 // pred_check_branch
          %176 = sbr.rel (%p174) target = $region28
        $region27: #{tpu_custom_call.1} parent=11 // pred_region
          _
        $region28: #{tpu_custom_call.1} parent=11 // pred_fallthru
          _
      $region12: #{tpu_custom_call.1} parent=5 // pred_fallthru
        _
      %p177 = scmp.lt.s32.totalorder %s14, 2
      // Predicated region
      $region29: #{tpu_custom_call.1} parent=5 // pred_check
        %p178 = pneg %p177
      $region30: #{tpu_custom_call.1} parent=5 // pred_check_branch
        %180 = sbr.rel (%p178) target = $region32
      $region31: #{tpu_custom_call.1} parent=5 // pred_region
        // Predicated region
        $region33: #{tpu_custom_call.1} parent=31 // pred_check
          %p181 = pneg %p34
        $region34: #{tpu_custom_call.1} parent=31 // pred_check_branch
          %183 = sbr.rel (%p181) target = $region36
        $region35: #{tpu_custom_call.1} parent=31 // pred_region
          %s184 = smul.u32 4, %s14
          %p185 = scmp.lt.s32.totalorder %s184, 7
          %s186 = scalar_select %p185, %s184, 7
          %s187 = smul.addr %s186, 4
          %s188 = scalar_lea.vmem %s0, %s187
          %s189 = smul.u32 4, %s14
        $region36: #{tpu_custom_call.1} parent=31 // pred_fallthru
          _
      $region32: #{tpu_custom_call.1} parent=5 // pred_fallthru
        _
      %p190 = scmp.le.s32.totalorder 1, %s14
      %p191 = scmp.lt.s32.totalorder %s14, 3
      %p192 = pnand %p190, %p191
      %p193 = pneg %p192
      // Predicated region
      $region37: #{tpu_custom_call.1} parent=5 // pred_check
        _
      $region38: #{tpu_custom_call.1} parent=5 // pred_check_branch
        %195 = sbr.rel (%p192) target = $region40
      $region39: #{tpu_custom_call.1} parent=5 // pred_region
        %s196 = ssub.s32 %s14, 1
        %s197 = smul.u32 4, %s19
        %p198 = scmp.lt.s32.totalorder %s197, 7
        %s199 = scalar_select %p198, %s197, 7
        %s200 = smul.addr %s199, 4
        %s201 = scalar_lea.vmem %s0, %s200
        %p202 = pneg %p40
        %p203 = pneg %p37
        %p204 = pneg %p61
        %p205 = pneg %p58
        %p206 = pneg %p82
        %p207 = pneg %p79
        %p208 = pneg %p103
        %p209 = pneg %p100
        %p210 = pneg %p124
        %p211 = pneg %p121
        %p212 = pneg %p150
        %p213 = pneg %p147
        %s214 = sand.u32 %s137, 1
        %s215 = scalar_lea.sflag [#allocation3], %s214
        %s216 = sand.u32 %s137, 1
        %s217 = smul.addr %s216, 32
        %s218 = scalar_lea.vmem [#allocation2], %s217
        %s219 = smul.u32 4, %s19
        %p220 = scmp.lt.s32.totalorder %s219, 7
        %s221 = scalar_select %p220, %s219, 7
        %s222 = smul.addr %s221, 4
        %s223 = scalar_lea.vmem %s0, %s222
        %s224 = smul.u32 4, %s19
        %s225 = smul.u32 4, %s19
        %v227 = vld [vmem:[%s223] sm:$0xf]
        %v228 = vld [vmem:[%s223 + $0x4] sm:$0xf]
        %v229 = vld [vmem:[%s223 + $0x8] sm:$0xf]
        %v230 = vld [vmem:[%s223 + $0xc] sm:$0xf]
        %v231 = vld [vmem:[%s1] sm:$0xf]
        %v232 = vld [vmem:[%s1 + $0x4] sm:$0xf]
        %v233 = vld [vmem:[%s1 + $0x8] sm:$0xf]
        %v234 = vld [vmem:[%s1 + $0xc] sm:$0xf]
        %v235 = vld [vmem:[%s1 + $0x10] sm:$0xf]
        %v236 = vld [vmem:[%s1 + $0x14] sm:$0xf]
        %v237 = vld [vmem:[%s2] sm:$0x1]
        %v239 = vlaneseq
        %v240 = vshrl.u32 %v239, 7
        %v241 = vsub.s32 0, %v240
        %v242 = vrot.slane %v237, %v241
        %v248 = vunpack.c.l.b16 %v227
        %v249 = vunpack.c.l.b16 %v228
        %v250 = vunpack.c.l.b16 %v229
        %v251 = vunpack.c.l.b16 %v230
        %v252 = vpack.c.b16 %v249, %v248
        %v253 = vpack.c.b16 %v251, %v250
        %v260 = vunpack.c.l.b16 %v231
        %v261 = vunpack.c.l.b16 %v232
        %v262 = vunpack.c.l.b16 %v233
        %v263 = vunpack.c.l.b16 %v234
        %v264 = vunpack.c.l.b16 %v235
        %v265 = vunpack.c.l.b16 %v236
        %v266 = vpack.c.b16 %v261, %v260
        %v267 = vpack.c.b16 %v263, %v262
        %v268 = vpack.c.b16 %v265, %v264
        %vm272 = vcmask 392192
        %v274 = vsel %vm272, %v252, 0
        %v277 = vsel %vm272, %v253, 0
        %279 = vmatprep.subr.bf16.mxu0 0
        %280 = vmatpush1.bf16.msra.mxu0 %v266
        %281 = vmatprep.subr.bf16.mxu0 0
        %282 = vmatpush1.bf16.msra.mxu0 %v267
        %283 = vmatprep.subr.bf16.mxu0 0
        %284 = vmatpush1.bf16.msra.mxu0 %v268
        %285 = vmatprep.subr.bf16.mxu0 0
        %286 = vmatpush1.bf16.msra.mxu0 0
        %287 = vmatprep.subr.bf16.mxu0 0
        %288 = vmatpush1.bf16.msra.mxu0 0
        %289 = vmatprep.subr.bf16.mxu0 0
        %290 = vmatpush1.bf16.msra.mxu0 0
        %291 = vmatprep.subr.bf16.mxu0 0
        %292 = vmatpush1.bf16.msra.mxu0 0
        %293 = vmatprep.subr.bf16.mxu0 0
        %294 = vmatpush1.bf16.msra.mxu0 0
        %295 = vmatprep.subr.bf16.mxu0 0
        %296 = vmatpush1.bf16.msra.mxu0 0
        %297 = vmatprep.subr.bf16.mxu0 0
        %298 = vmatpush1.bf16.msra.mxu0 0
        %299 = vmatprep.subr.bf16.mxu0 0
        %300 = vmatpush1.bf16.msra.mxu0 0
        %301 = vmatprep.subr.bf16.mxu0 0
        %302 = vmatpush1.bf16.msra.mxu0 0
        %303 = vmatprep.subr.bf16.mxu0 0
        %304 = vmatpush1.bf16.msra.mxu0 0
        %305 = vmatprep.subr.bf16.mxu0 0
        %306 = vmatpush1.bf16.msra.mxu0 0
        %307 = vmatprep.subr.bf16.mxu0 0
        %308 = vmatpush1.bf16.msra.mxu0 0
        %309 = vmatprep.subr.bf16.mxu0 0
        %310 = vmatpush1.bf16.msra.mxu0 0
        %311 = vmatprep.mubr.bf16.mxu0 0
        %312 = vmatmul.mubr.bf16.gmra.mrb[0].mxu0 %v274
        %v313 = vpop.f32.mrb[0].mxu0
        %v314 = vadd.f32 %v242, %v313
        %v315 = vpop.f32.mrb[0].mxu0
        %v316 = vpop.f32.mrb[0].mxu0
        %v317 = vadd.f32 %v242, %v316
        %v318 = vpop.f32.mrb[0].mxu0
        %319 = vmatprep.mubr.bf16.mxu0 0
        %320 = vmatmul.mubr.bf16.gmra.mrb[0].mxu0 %v277
        %v321 = vpop.f32.mrb[0].mxu0
        %v322 = vadd.f32 %v242, %v321
        %v323 = vpop.f32.mrb[0].mxu0
        %v324 = vpop.f32.mrb[0].mxu0
        %v325 = vadd.f32 %v242, %v324
        %v326 = vpop.f32.mrb[0].mxu0
        %327 = vdwg.mxu0
        %328 = vst [vmem:[%s218] sm:$0xff] %v314
        %329 = vst [vmem:[%s218 + $0x8] sm:$0xff] %v317
        %330 = vst [vmem:[%s218 + $0x10] sm:$0xff] %v322
        %331 = vst [vmem:[%s218 + $0x18] sm:$0xff] %v325
        %s332 = sand.u32 %s137, 1
        %s333 = scalar_lea.sflag [#allocation3], %s332
        %s334 = sand.u32 %s137, 1
        %s335 = smul.addr %s334, 32
        %s336 = scalar_lea.vmem [#allocation2], %s335
        // Predicated region
        $region41: #{tpu_custom_call.1} parent=39 // pred_check
          %p337 = pneg %p147
        $region42: #{tpu_custom_call.1} parent=39 // pred_check_branch
          %339 = sbr.rel (%p337) target = $region44
        $region43: #{tpu_custom_call.1} parent=39 // pred_region
          %s340 = smul.u32 4, %s19
          %s342 = ssub.s32 512, 512
          %343 = vsyncadd %s333, %s342
          %s344 = smul.addr %s340, 128
          %s345 = scalar_lea.hbm %s5, %s344
          %s346 = sshll.u32 %s336, 4
          %s347 = int_to_ptr.vmem [resolvable:$true] %s346
          %352 = dma.vmem_to_hbm [thread:$0]  %s347, 512, %s345, %s333, 128, 128, 8
        $region44: #{tpu_custom_call.1} parent=39 // pred_fallthru
          _
      $region40: #{tpu_custom_call.1} parent=5 // pred_fallthru
        _
      %p353 = scmp.le.s32.totalorder 2, %s14
      // Predicated region
      $region45: #{tpu_custom_call.1} parent=5 // pred_check
        %p354 = pneg %p353
      $region46: #{tpu_custom_call.1} parent=5 // pred_check_branch
        %356 = sbr.rel (%p354) target = $region48
      $region47: #{tpu_custom_call.1} parent=5 // pred_region
        %s357 = ssub.s32 %s14, 2
        // Predicated region
        $region49: #{tpu_custom_call.1} parent=47 // pred_check
          %p358 = pneg %p153
        $region50: #{tpu_custom_call.1} parent=47 // pred_check_branch
          %360 = sbr.rel (%p358) target = $region52
        $region51: #{tpu_custom_call.1} parent=47 // pred_region
          %s361 = sand.u32 %s138, 1
          %s362 = scalar_lea.sflag [#allocation3], %s361
          %s363 = sand.u32 %s138, 1
          %s364 = smul.addr %s363, 32
          %s365 = scalar_lea.vmem [#allocation2], %s364
          %366 = dma.done %s362, 512
        $region52: #{tpu_custom_call.1} parent=47 // pred_fallthru
          _
      $region48: #{tpu_custom_call.1} parent=5 // pred_fallthru
        _
    $region6: #{tpu_custom_call.1} parent=1 // loop_footer
      %s18 = sadd.s32 1, %s14
    $region7: #{tpu_custom_call.1} parent=1 // loop_footer_branch
      %13 = sbr.rel target = $region3
    $region8: #{tpu_custom_call.1} parent=1 // loop_exit
      _
    %367 = vsyncpa [#allocation3], 1
    %s368 = scalar_lea.sflag [#allocation3], 1
    %369 = vsyncpa %s368, 1

</llo_original>
